<compile_context>
chip_gen: v7x
topology: tpu7x:2x2x1
jax: 0.10.0
libtpu: 0.0.40
codegen_flags: <defaults>
</compile_context>

<pallas_src>
import jax
import jax.numpy as jnp
from jax.experimental import pallas as pl
from jax.experimental.pallas import tpu as pltpu


def _norm_residual_kernel(x_ref, wT_ref, c_ref, o_ref):
    # x_ref:  (nb, C, hw_tile)  activations, spatial on the lane axis
    # wT_ref: (C, C)            folded weight, (out_ch, in_ch)
    # c_ref:  (C, 1)            folded bias, broadcast over lanes
    # o_ref:  (nb, C, hw_tile)
    w = wT_ref[...]
    c = c_ref[...]
    nb = x_ref.shape[0]

    def _one(i):
        x = x_ref[i]                                             # (C, hw_tile)
        h = jnp.dot(w, x, preferred_element_type=jnp.float32,
                    precision=jax.lax.Precision.HIGHEST)          # MXU (tiny)
        o_ref[i] = (x + h + c).astype(o_ref.dtype)               # residual+bias

    if nb <= 8:                       # static -> fully unrolled
        for i in range(nb):
            _one(i)
    else:                             # many small images folded into one step
        @pl.loop(0, nb)
        def _(i):
            _one(i)


def _round_up(v, m):
    return -(-v // m) * m


def _choose_tiling(N, C, HW, *, target_bytes=2 << 20):
    """Pick (nb, hw_tile, hw_pad): ~target_bytes moved per direction per grid
    step, hw_tile a multiple of 128 dividing hw_pad, and >= 2 grid steps kept
    whenever the problem allows it (v7x has 2 TensorCores)."""
    c_pad = max(8, _round_up(C, 8))                        # f32 sublane padding
    lane_budget = max(128, (target_bytes // (4 * c_pad)) // 128 * 128)

    hw_pad = _round_up(HW, 128)                            # lane-dense padding
    units = hw_pad // 128
    # Largest multiple-of-128 divisor of hw_pad that fits the lane budget.
    best = 1
    for d in range(min(units, lane_budget // 128), 0, -1):
        if units % d == 0:
            best = d
            break
    hw_tile = 128 * best
    n_hw = hw_pad // hw_tile

    # Batch-block when a single image does not reach the byte target.
    nb = 1
    if n_hw == 1 and N > 1:
        per_img = c_pad * hw_tile * 4
        nb = int(min(N, max(1, target_bytes // per_img)))
        while N % nb != 0:
            nb -= 1

    # Keep >= 2 grid steps when possible so both v7x TensorCores get work.
    if (N // nb) * n_hw < 2:
        if nb > 1:
            while nb > 1 and N // nb < 2:
                nb -= 1
                while N % nb != 0:
                    nb -= 1
        elif N == 1 and n_hw == 1 and hw_tile % 256 == 0:
            hw_tile //= 2
            n_hw = hw_pad // hw_tile
    return nb, hw_tile, hw_pad


def normalized_residual(x_nchw, mean, std, w, b, *, target_block_bytes=2 << 20):
    """y = x + conv1x1((x - mean)/std; w, b) * std, fused into one Pallas call.

    Args:
      x_nchw: (N, C, H, W) float32.
      mean, std, b: (C,) float32.
      w: (C_in, C_out) float32.  NOTE: PyTorch Conv2d weight is
         (C_out, C_in, 1, 1); pass `weight[:, :, 0, 0].T` for that convention.
    """
    N, C, H, W = x_nchw.shape
    HW = H * W
    dtype = x_nchw.dtype

    # Fold normalization / un-scaling into weight & bias (tiny (C,C) precompute).
    inv_std = 1.0 / std
    w_fold = (w * std[None, :]) * inv_std[:, None]                 # (C_in, C_out)
    wT = jnp.transpose(w_fold)                                     # (C_out, C_in)
    c2 = (b * std - jnp.matmul(mean, w_fold,
                               precision=jax.lax.Precision.HIGHEST)).reshape(C, 1)

    nb, hw_tile, hw_pad = _choose_tiling(N, C, HW, target_bytes=target_block_bytes)

    x3 = x_nchw.reshape(N, C, HW)            # NCHW is contiguous: free reshape
    if hw_pad != HW:
        # Lane-dense padding keeps vector stores unmasked; padded columns are
        # computed (harmlessly) and sliced away below.
        x3 = jnp.pad(x3, ((0, 0), (0, 0), (0, hw_pad - HW)))

    # VMEM budget: double-buffered in+out blocks + params + slack, clamped so
    # it stays safe on v7x's 64 MiB physical VMEM (and fine on v5e/v6e).
    c_pad = max(8, _round_up(C, 8))
    block_bytes = nb * c_pad * hw_tile * 4
    vmem_limit = int(min(max(32 << 20, 4 * block_bytes + (4 << 20)), 48 << 20))

    out3 = pl.pallas_call(
        _norm_residual_kernel,
        out_shape=jax.ShapeDtypeStruct((N, C, hw_pad), dtype),
        grid_spec=pltpu.PrefetchScalarGridSpec(
            num_scalar_prefetch=0,
            grid=(N // nb, hw_pad // hw_tile),
            in_specs=[
                pl.BlockSpec((nb, C, hw_tile), lambda n, j: (n, 0, j)),  # x
                pl.BlockSpec((C, C), lambda n, j: (0, 0)),               # W'^T
                pl.BlockSpec((C, 1), lambda n, j: (0, 0)),               # c
            ],
            out_specs=pl.BlockSpec((nb, C, hw_tile), lambda n, j: (n, 0, j)),
        ),
        compiler_params=pltpu.CompilerParams(
            dimension_semantics=("parallel", "parallel"),
            vmem_limit_bytes=vmem_limit,
        ),
    )(x3, wT, c2)

    if hw_pad != HW:
        out3 = out3[:, :, :HW]
    return out3.reshape(N, C, H, W)


if __name__ == "__main__":
    key = jax.random.PRNGKey(0)
    kx, kw, kb, km, ks = jax.random.split(key, 5)

    N, C, H, W = 2, 4, 16, 16
    x = jax.random.normal(kx, (N, C, H, W), dtype=jnp.float32)

    # Deterministic synthetic parameters (inner model = 1x1 Conv2d(C, C)).
    w = jax.random.normal(kw, (C, C), dtype=jnp.float32) * 0.1   # [in_ch, out_ch]
    b = jax.random.normal(kb, (C,), dtype=jnp.float32) * 0.1
    mean = jax.random.normal(km, (C,), dtype=jnp.float32) * 0.5
    std = jax.random.uniform(ks, (C,), dtype=jnp.float32,
                             minval=0.5, maxval=1.5)

    out = jax.block_until_ready(normalized_residual(x, mean, std, w, b))

    # Pure-JAX reference (original, un-folded math, NCHW broadcasting exactly
    # like the PyTorch module).
    mean_b = mean.reshape(1, C, 1, 1)
    std_b = std.reshape(1, C, 1, 1)
    xn = (x - mean_b) / std_b
    inner = jnp.einsum("nchw,cd->ndhw", xn, w,
                       precision=jax.lax.Precision.HIGHEST) + b.reshape(1, C, 1, 1)
    ref = x + inner * std_b
    assert jnp.allclose(out, ref, atol=1e-5, rtol=1e-5), "mismatch vs reference"

    print("KERNEL_OK")
</pallas_src>

<mosaic_0001>
module attributes {stable_mosaic.version = 11 : i64} {
  func.func @_norm_residual_kernel(%arg0: i32, %arg1: i32, %arg2: memref<1x4x256xf32, #tpu.memory_space<vmem>>, %arg3: memref<4x4xf32, #tpu.memory_space<vmem>>, %arg4: memref<4x1xf32, #tpu.memory_space<vmem>>, %arg5: memref<1x4x256xf32, #tpu.memory_space<vmem>>) attributes {dimension_semantics = [#tpu.dimension_semantics<parallel>, #tpu.dimension_semantics<parallel>], iteration_bounds = array<i64: 2, 1>, scalar_prefetch = 0 : i64, scratch_operands = 0 : i64, tpu.core_type = #tpu.core_type<tc>, window_params = [{transform_indices = @transform_0, window_bounds = array<i64: 1, 4, 256>}, {pipeline_mode = #tpu.pipeline_mode<synchronous>, transform_indices = @transform_1, window_bounds = array<i64: 4, 4>}, {pipeline_mode = #tpu.pipeline_mode<synchronous>, transform_indices = @transform_2, window_bounds = array<i64: 4, 1>}, {transform_indices = @transform_3, window_bounds = array<i64: 1, 4, 256>}]} {
    %c0 = arith.constant 0 : index
    %c0_0 = arith.constant 0 : index
    %0 = vector.load %arg3[%c0, %c0_0] : memref<4x4xf32, #tpu.memory_space<vmem>>, vector<4x4xf32>
    %c0_1 = arith.constant 0 : index
    %c0_2 = arith.constant 0 : index
    %1 = vector.load %arg4[%c0_1, %c0_2] : memref<4x1xf32, #tpu.memory_space<vmem>>, vector<4x1xf32>
    %c0_3 = arith.constant 0 : index
    %c0_4 = arith.constant 0 : index
    %c0_5 = arith.constant 0 : index
    %2 = vector.load %arg2[%c0_3, %c0_4, %c0_5] : memref<1x4x256xf32, #tpu.memory_space<vmem>>, vector<1x4x256xf32>
    %3 = vector.shape_cast %2 : vector<1x4x256xf32> to vector<4x256xf32>
    %cst = arith.constant dense<0.000000e+00> : vector<4x256xf32>
    %4 = tpu.matmul %0, %3, %cst {dimension_numbers = #tpu.dot_dimension_numbers<[1], [0], [0], [1], [0, 0, 1, 1], [], []>, precision = #tpu.contract_precision<fp32>} : vector<4x4xf32>, vector<4x256xf32>, vector<4x256xf32> -> vector<4x256xf32>
    %5 = arith.addf %3, %4 : vector<4x256xf32>
    %6 = vector.broadcast %1 : vector<4x1xf32> to vector<4x256xf32>
    %7 = arith.addf %5, %6 : vector<4x256xf32>
    %c0_6 = arith.constant 0 : index
    %c0_7 = arith.constant 0 : index
    %c0_8 = arith.constant 0 : index
    %8 = vector.load %arg5[%c0_6, %c0_7, %c0_8] : memref<1x4x256xf32, #tpu.memory_space<vmem>>, vector<1x4x256xf32>
    %9 = vector.shape_cast %8 : vector<1x4x256xf32> to vector<4x256xf32>
    %10 = vector.shape_cast %7 : vector<4x256xf32> to vector<1x4x256xf32>
    tpu.vector_store %arg5[%c0_6, %c0_7, %c0_8], %10 {strides = array<i32>} : memref<1x4x256xf32, #tpu.memory_space<vmem>>, vector<1x4x256xf32>,
    return
  }
  func.func @transform_0(%arg0: i32, %arg1: i32) -> (i32, i32, i32) {
    %c0_i32 = arith.constant 0 : i32
    %c0_i32_0 = arith.constant 0 : i32
    return %arg0, %c0_i32, %arg1 : i32, i32, i32
  }
  func.func @transform_1(%arg0: i32, %arg1: i32) -> (i32, i32) {
    %c0_i32 = arith.constant 0 : i32
    %c0_i32_0 = arith.constant 0 : i32
    %c0_i32_1 = arith.constant 0 : i32
    return %c0_i32, %c0_i32_0 : i32, i32
  }
  func.func @transform_2(%arg0: i32, %arg1: i32) -> (i32, i32) {
    %c0_i32 = arith.constant 0 : i32
    %c0_i32_0 = arith.constant 0 : i32
    %c0_i32_1 = arith.constant 0 : i32
    return %c0_i32, %c0_i32_0 : i32, i32
  }
  func.func @transform_3(%arg0: i32, %arg1: i32) -> (i32, i32, i32) {
    %c0_i32 = arith.constant 0 : i32
    %c0_i32_0 = arith.constant 0 : i32
    return %arg0, %c0_i32, %arg1 : i32, i32, i32
  }
}

</mosaic_0001>

<llo_original>
// kernel: tpu_custom_call.1
$region0: #{tpu_custom_call.1}
  #allocation0 [shape = 'u32[]', space=smem, size = 0x4, offset = 0x4, fixed_abs, tag = 'smem constant byte address 0x4 - core index']
  #allocation1 [shape = 'u32[144,128]{1,0:T(1,128)}', space=vmem, size = 0x12000, scoped, tag = 'internal scratch']
  %s0 = inlined_call_operand.hbm [shape: f32[2,4,256], index: 0, kind: input, shape index: {}]
  %s1 = inlined_call_operand.vmem [shape: f32[4,4], index: 1, kind: input, shape index: {}]
  %s2 = inlined_call_operand.vmem [shape: f32[4,1], index: 2, kind: input, shape index: {}]
  %s3 = inlined_call_operand.hbm [shape: f32[2,4,256], index: 3, kind: output, shape index: {}]
  %s4 = sld [smem:[#allocation0]]
  $region49: #{tpu_custom_call.1} parent=0
    _
  %s6 = ssub.s32 1, %s4
  %s7 = scalar_select 0, %s6, %s4
  $region1: #{tpu_custom_call.1} parent=0
    #allocation2 [shape = 'u8[8192]{0}', space=vmem, size = 0x2000, scoped, tag = 'input window, operand 0']
    #allocation3 [shape = 's32[2]{0}', space=sflag, size = 0x8, scoped, tag = 'scoped memory for tpu_custom_call.1']
    #allocation4 [shape = 's32[2]{0}', space=sflag, size = 0x8, scoped, tag = 'scoped memory for tpu_custom_call.1']
    #allocation5 [shape = 'u8[8192]{0}', space=vmem, size = 0x2000, scoped, tag = 'output window, operand 0']
    %8 = vsyncpa [#allocation3], 0
    %s9 = scalar_lea.sflag [#allocation3], 1
    %10 = vsyncpa %s9, 0
    %11 = vsyncpa [#allocation4], 0
    %s12 = scalar_lea.sflag [#allocation4], 1
    %13 = vsyncpa %s12, 0
    loop: start=0, step=1, limit=4
    $region2: #{tpu_custom_call.1} parent=1 // loop_pre_header
      _
    $region3: #{tpu_custom_call.1} parent=1 // loop_header
      %s15 = sphi 0, %s19
      %p16 = scmp.ge.s32.totalorder %s15, 4
      %s22 = sphi 0, %s34
      %s23 = sphi 0, %s30
      %s24 = sphi 0, %s22
      %s25 = sphi 0, %s23
      %s26 = sphi 0, %s24
      %s27 = sphi 0, %s25
      %s39 = sphi 0, %s41
      %s42 = sphi 0, %s39
      %s43 = sphi 0, %s42
      %s59 = sphi 0, %s43
      %s63 = sphi 0, %s63
      %s65 = sphi 0, %s63
      %s66 = sphi 0, %s65
      %s80 = sphi 0, %s66
      %s84 = sphi 0, %s84
      %s86 = sphi 0, %s84
      %s87 = sphi 0, %s86
      %s101 = sphi 0, %s87
      %s109 = sphi 0, %s111
      %s112 = sphi 0, %s109
      %s113 = sphi 0, %s112
      %s129 = sphi 0, %s113
    $region4: #{tpu_custom_call.1} parent=1 // loop_header_branch
      %18 = sbr.rel (%p16) target = $region8
    $region5: #{tpu_custom_call.1} parent=1 // loop_body
      %s20 = ssub.s32 %s15, 1
      %s21 = ssub.s32 %s15, 2
      %s28 = sadd.s32 1, %s23
      %p29 = scmp.ge.s32.totalorder %s28, 1
      %s30 = scalar_select %p29, 0, %s28
      %s31 = sadd.s32 1, %s22
      %s32 = scalar_select %p29, %s31, %s22
      %p33 = scmp.ge.s32.totalorder %s32, 2
      %s34 = scalar_select %p33, 0, %s32
      %s35 = ssub.s32 %s22, %s34
      %s36 = ssub.s32 %s23, %s30
      %s37 = sor.u32 %s35, %s36
      %p38 = scmp.eq.s32.totalorder %s37, 0
      %s40 = sadd.s32 %s39, 1
      %s41 = scalar_select %p38, %s39, %s40
      %p44 = pneg %p38
      %p45 = scmp.eq.s32.totalorder %s15, 1
      %p46 = por %p44, %p45
      %p47 = scmp.ne.s32.totalorder %s39, %s42
      %p48 = scmp.eq.s32.totalorder %s15, 0
      %p49 = por %p47, %p48
      %p50 = scmp.ne.s32.totalorder %s39, %s42
      %p51 = scmp.eq.s32.totalorder %s20, 1
      %p52 = por %p50, %p51
      %p53 = scmp.ne.s32.totalorder %s42, %s43
      %p54 = scmp.eq.s32.totalorder %s20, 0
      %p55 = por %p53, %p54
      %p56 = scmp.ne.s32.totalorder %s42, %s43
      %p57 = scmp.eq.s32.totalorder %s21, 1
      %p58 = por %p56, %p57
      %p60 = scmp.ne.s32.totalorder %s43, %s59
      %p61 = scmp.eq.s32.totalorder %s21, 0
      %p62 = por %p60, %p61
      %s64 = sadd.s32 %s63, 1
      %p67 = scmp.eq.s32.totalorder %s15, 1
      %p68 = scmp.ne.s32.totalorder %s63, %s65
      %p69 = scmp.eq.s32.totalorder %s15, 0
      %p70 = por %p68, %p69
      %p71 = scmp.ne.s32.totalorder %s63, %s65
      %p72 = scmp.eq.s32.totalorder %s20, 1
      %p73 = por %p71, %p72
      %p74 = scmp.ne.s32.totalorder %s65, %s66
      %p75 = scmp.eq.s32.totalorder %s20, 0
      %p76 = por %p74, %p75
      %p77 = scmp.ne.s32.totalorder %s65, %s66
      %p78 = scmp.eq.s32.totalorder %s21, 1
      %p79 = por %p77, %p78
      %p81 = scmp.ne.s32.totalorder %s66, %s80
      %p82 = scmp.eq.s32.totalorder %s21, 0
      %p83 = por %p81, %p82
      %s85 = sadd.s32 %s84, 1
      %p88 = scmp.eq.s32.totalorder %s15, 1
      %p89 = scmp.ne.s32.totalorder %s84, %s86
      %p90 = scmp.eq.s32.totalorder %s15, 0
      %p91 = por %p89, %p90
      %p92 = scmp.ne.s32.totalorder %s84, %s86
      %p93 = scmp.eq.s32.totalorder %s20, 1
      %p94 = por %p92, %p93
      %p95 = scmp.ne.s32.totalorder %s86, %s87
      %p96 = scmp.eq.s32.totalorder %s20, 0
      %p97 = por %p95, %p96
      %p98 = scmp.ne.s32.totalorder %s86, %s87
      %p99 = scmp.eq.s32.totalorder %s21, 1
      %p100 = por %p98, %p99
      %p102 = scmp.ne.s32.totalorder %s87, %s101
      %p103 = scmp.eq.s32.totalorder %s21, 0
      %p104 = por %p102, %p103
      %s105 = ssub.s32 %s22, %s34
      %s106 = ssub.s32 %s23, %s30
      %s107 = sor.u32 %s105, %s106
      %p108 = scmp.eq.s32.totalorder %s107, 0
      %s110 = sadd.s32 %s109, 1
      %s111 = scalar_select %p108, %s109, %s110
      %p114 = pneg %p108
      %p115 = scmp.eq.s32.totalorder %s15, 1
      %p116 = por %p114, %p115
      %p117 = scmp.ne.s32.totalorder %s109, %s112
      %p118 = scmp.eq.s32.totalorder %s15, 0
      %p119 = por %p117, %p118
      %p120 = scmp.ne.s32.totalorder %s109, %s112
      %p121 = scmp.eq.s32.totalorder %s20, 1
      %p122 = por %p120, %p121
      %p123 = scmp.ne.s32.totalorder %s112, %s113
      %p124 = scmp.eq.s32.totalorder %s20, 0
      %p125 = por %p123, %p124
      %p126 = scmp.ne.s32.totalorder %s112, %s113
      %p127 = scmp.eq.s32.totalorder %s21, 1
      %p128 = por %p126, %p127
      %p130 = scmp.ne.s32.totalorder %s113, %s129
      %p131 = scmp.eq.s32.totalorder %s21, 0
      %p132 = por %p130, %p131
      %p133 = scmp.le.s32.totalorder 1, %s15
      %p134 = scmp.lt.s32.totalorder %s15, 3
      %p135 = pnand %p133, %p134
      %p136 = pneg %p135
      // Predicated region
      $region9: #{tpu_custom_call.1} parent=5 // pred_check
        _
      $region10: #{tpu_custom_call.1} parent=5 // pred_check_branch
        %138 = sbr.rel (%p135) target = $region12
      $region11: #{tpu_custom_call.1} parent=5 // pred_region
        %s139 = ssub.s32 %s15, 1
        // Predicated region
        $region13: #{tpu_custom_call.1} parent=11 // pred_check
          %p140 = pneg %p76
        $region14: #{tpu_custom_call.1} parent=11 // pred_check_branch
          %142 = sbr.rel (%p140) target = $region16
        $region15: #{tpu_custom_call.1} parent=11 // pred_region
          _
        $region16: #{tpu_custom_call.1} parent=11 // pred_fallthru
          _
        // Predicated region
        $region17: #{tpu_custom_call.1} parent=11 // pred_check
          %p143 = pneg %p97
        $region18: #{tpu_custom_call.1} parent=11 // pred_check_branch
          %145 = sbr.rel (%p143) target = $region20
        $region19: #{tpu_custom_call.1} parent=11 // pred_region
          _
        $region20: #{tpu_custom_call.1} parent=11 // pred_fallthru
          _
      $region12: #{tpu_custom_call.1} parent=5 // pred_fallthru
        _
      %p146 = scmp.lt.s32.totalorder %s15, 2
      // Predicated region
      $region21: #{tpu_custom_call.1} parent=5 // pred_check
        %p147 = pneg %p146
      $region22: #{tpu_custom_call.1} parent=5 // pred_check_branch
        %149 = sbr.rel (%p147) target = $region24
      $region23: #{tpu_custom_call.1} parent=5 // pred_region
        // Predicated region
        $region25: #{tpu_custom_call.1} parent=23 // pred_check
          %p150 = pneg %p49
        $region26: #{tpu_custom_call.1} parent=23 // pred_check_branch
          %152 = sbr.rel (%p150) target = $region28
        $region27: #{tpu_custom_call.1} parent=23 // pred_region
          %s153 = sand.u32 %s39, 1
          %s154 = scalar_lea.sflag [#allocation3], %s153
          %s155 = sand.u32 %s39, 1
          %s156 = smul.addr %s155, 8
          %s157 = scalar_lea.vmem [#allocation2], %s156
          %s158 = smul.u32 2, %s23
          %s160 = ssub.s32 128, 128
          %161 = vsyncadd %s154, %s160
          %s162 = smul.addr %s22, 2
          %s163 = sadd.s32 %s158, %s162
          %s164 = smul.addr %s163, 64
          %s165 = scalar_lea.hbm %s0, %s164
          %s167 = sshll.u32 %s157, 4
          %s168 = int_to_ptr.vmem [resolvable:$true] %s167
          %170 = dma.hbm_to_vmem [thread:$0]  %s165, 128, %s168, %s154
        $region28: #{tpu_custom_call.1} parent=23 // pred_fallthru
          _
      $region24: #{tpu_custom_call.1} parent=5 // pred_fallthru
        _
      %p171 = scmp.le.s32.totalorder 1, %s15
      %p172 = scmp.lt.s32.totalorder %s15, 3
      %p173 = pnand %p171, %p172
      %p174 = pneg %p173
      // Predicated region
      $region29: #{tpu_custom_call.1} parent=5 // pred_check
        _
      $region30: #{tpu_custom_call.1} parent=5 // pred_check_branch
        %176 = sbr.rel (%p173) target = $region32
      $region31: #{tpu_custom_call.1} parent=5 // pred_region
        %s177 = ssub.s32 %s15, 1
        %s178 = sand.u32 %s42, 1
        %s179 = scalar_lea.sflag [#allocation3], %s178
        %s180 = sand.u32 %s42, 1
        %s181 = smul.addr %s180, 8
        %s182 = scalar_lea.vmem [#allocation2], %s181
        // Predicated region
        $region33: #{tpu_custom_call.1} parent=31 // pred_check
          %p183 = pneg %p55
        $region34: #{tpu_custom_call.1} parent=31 // pred_check_branch
          %185 = sbr.rel (%p183) target = $region36
        $region35: #{tpu_custom_call.1} parent=31 // pred_region
          %186 = dma.done %s179, 128
        $region36: #{tpu_custom_call.1} parent=31 // pred_fallthru
          _
        %s187 = sand.u32 %s42, 1
        %s188 = scalar_lea.sflag [#allocation3], %s187
        %s189 = sand.u32 %s42, 1
        %s190 = smul.addr %s189, 8
        %s191 = scalar_lea.vmem [#allocation2], %s190
        %p192 = pneg %p55
        %p193 = pneg %p52
        %p194 = pneg %p76
        %p195 = pneg %p73
        %p196 = pneg %p97
        %p197 = pneg %p94
        %p198 = pneg %p125
        %p199 = pneg %p122
        %s200 = sand.u32 %s112, 1
        %s201 = scalar_lea.sflag [#allocation4], %s200
        %s202 = sand.u32 %s112, 1
        %s203 = smul.addr %s202, 8
        %s204 = scalar_lea.vmem [#allocation5], %s203
        %s205 = smul.u32 2, %s25
        %s206 = smul.u32 2, %s25
        %v207 = vld [vmem:[%s1] sm:$0xf]
        %v208 = vld [vmem:[%s2] sm:$0xf]
        %v209 = vld [vmem:[%s182] sm:$0xff]
        %v211 = vcombine.high %v209, %v209
        %vm212 = vcmask 31744
        %v214 = vsel %vm212, %v207, 0
        %vm216 = vcmask 1043456
        %v217 = vsel %vm216, %v209, 0
        %v219 = vsel %vm216, %v211, 0
        %v221 = vand.u32 %v219, 4294901760
        %222 = vmatprep.subr.mxu0 %v221
        %v223 = vand.u32 %v217, 4294901760
        %224 = vmatpush1.msra.mxu0 %v223
        %225 = vmatprep.subr.mxu0 0.0
        %226 = vmatpush1.msra.mxu0 0.0
        %227 = vmatprep.subr.mxu0 0.0
        %228 = vmatpush1.msra.mxu0 0.0
        %229 = vmatprep.subr.mxu0 0.0
        %230 = vmatpush1.msra.mxu0 0.0
        %231 = vmatprep.subr.mxu0 0.0
        %232 = vmatpush1.msra.mxu0 0.0
        %233 = vmatprep.subr.mxu0 0.0
        %234 = vmatpush1.msra.mxu0 0.0
        %235 = vmatprep.subr.mxu0 0.0
        %236 = vmatpush1.msra.mxu0 0.0
        %237 = vmatprep.subr.mxu0 0.0
        %238 = vmatpush1.msra.mxu0 0.0
        %239 = vmatprep.subr.mxu0 0.0
        %240 = vmatpush1.msra.mxu0 0.0
        %241 = vmatprep.subr.mxu0 0.0
        %242 = vmatpush1.msra.mxu0 0.0
        %243 = vmatprep.subr.mxu0 0.0
        %244 = vmatpush1.msra.mxu0 0.0
        %245 = vmatprep.subr.mxu0 0.0
        %246 = vmatpush1.msra.mxu0 0.0
        %247 = vmatprep.subr.mxu0 0.0
        %248 = vmatpush1.msra.mxu0 0.0
        %249 = vmatprep.subr.mxu0 0.0
        %250 = vmatpush1.msra.mxu0 0.0
        %251 = vmatprep.subr.mxu0 0.0
        %252 = vmatpush1.msra.mxu0 0.0
        %253 = vmatprep.subr.mxu0 0.0
        %254 = vmatpush1.msra.mxu0 0.0
        %255 = vmatprep.subr.mxu0 0.0
        %256 = vmatpush1.msra.mxu0 0.0
        %257 = vmatprep.subr.mxu0 0.0
        %258 = vmatpush1.msra.mxu0 0.0
        %259 = vmatprep.subr.mxu0 0.0
        %260 = vmatpush1.msra.mxu0 0.0
        %261 = vmatprep.subr.mxu0 0.0
        %262 = vmatpush1.msra.mxu0 0.0
        %263 = vmatprep.subr.mxu0 0.0
        %264 = vmatpush1.msra.mxu0 0.0
        %265 = vmatprep.subr.mxu0 0.0
        %266 = vmatpush1.msra.mxu0 0.0
        %267 = vmatprep.subr.mxu0 0.0
        %268 = vmatpush1.msra.mxu0 0.0
        %269 = vmatprep.subr.mxu0 0.0
        %270 = vmatpush1.msra.mxu0 0.0
        %271 = vmatprep.subr.mxu0 0.0
        %272 = vmatpush1.msra.mxu0 0.0
        %273 = vmatprep.subr.mxu0 0.0
        %274 = vmatpush1.msra.mxu0 0.0
        %275 = vmatprep.subr.mxu0 0.0
        %276 = vmatpush1.msra.mxu0 0.0
        %277 = vmatprep.subr.mxu0 0.0
        %278 = vmatpush1.msra.mxu0 0.0
        %279 = vmatprep.subr.mxu0 0.0
        %280 = vmatpush1.msra.mxu0 0.0
        %281 = vmatprep.subr.mxu0 0.0
        %282 = vmatpush1.msra.mxu0 0.0
        %283 = vmatprep.subr.mxu0 0.0
        %284 = vmatpush1.msra.mxu0 0.0
        %285 = vmatprep.subr.mxu0 0.0
        %286 = vmatpush1.msra.mxu0 0.0
        %287 = vmatprep.mubr.f32.mxu0 0.0
        %v288 = vand.u32 %v214, 4294901760
        %v289 = vsub.f32 %v214, %v288
        %v290 = vand.u32 %v289, 4294901760
        %v291 = vsub.f32 %v289, %v290
        %v292 = vand.u32 %v291, 4294901760
        %293 = vmatmul.mubr.f32.gmra.mrb[0].mxu0 %v292
        %v294 = vpop.f32.mrb[0].mxu0
        %v295 = vadd.f32 0.0, %v294
        %v296 = vpop.f32.mrb[0].mxu0
        %v297 = vadd.f32 0.0, %v296
        %298 = vdwg.mxu0
        %v299 = vand.u32 %v219, 4294901760
        %v300 = vsub.f32 %v219, %v299
        %v301 = vand.u32 %v300, 4294901760
        %v302 = vsub.f32 %v300, %v301
        %v303 = vand.u32 %v302, 4294901760
        %304 = vmatprep.subr.mxu0 %v303
        %v305 = vand.u32 %v217, 4294901760
        %v306 = vsub.f32 %v217, %v305
        %v307 = vand.u32 %v306, 4294901760
        %v308 = vsub.f32 %v306, %v307
        %v309 = vand.u32 %v308, 4294901760
        %310 = vmatpush1.msra.mxu0 %v309
        %311 = vmatprep.subr.mxu0 0.0
        %312 = vmatpush1.msra.mxu0 0.0
        %313 = vmatprep.subr.mxu0 0.0
        %314 = vmatpush1.msra.mxu0 0.0
        %315 = vmatprep.subr.mxu0 0.0
        %316 = vmatpush1.msra.mxu0 0.0
        %317 = vmatprep.subr.mxu0 0.0
        %318 = vmatpush1.msra.mxu0 0.0
        %319 = vmatprep.subr.mxu0 0.0
        %320 = vmatpush1.msra.mxu0 0.0
        %321 = vmatprep.subr.mxu0 0.0
        %322 = vmatpush1.msra.mxu0 0.0
        %323 = vmatprep.subr.mxu0 0.0
        %324 = vmatpush1.msra.mxu0 0.0
        %325 = vmatprep.subr.mxu0 0.0
        %326 = vmatpush1.msra.mxu0 0.0
        %327 = vmatprep.subr.mxu0 0.0
        %328 = vmatpush1.msra.mxu0 0.0
        %329 = vmatprep.subr.mxu0 0.0
        %330 = vmatpush1.msra.mxu0 0.0
        %331 = vmatprep.subr.mxu0 0.0
        %332 = vmatpush1.msra.mxu0 0.0
        %333 = vmatprep.subr.mxu0 0.0
        %334 = vmatpush1.msra.mxu0 0.0
        %335 = vmatprep.subr.mxu0 0.0
        %336 = vmatpush1.msra.mxu0 0.0
        %337 = vmatprep.subr.mxu0 0.0
        %338 = vmatpush1.msra.mxu0 0.0
        %339 = vmatprep.subr.mxu0 0.0
        %340 = vmatpush1.msra.mxu0 0.0
        %341 = vmatprep.subr.mxu0 0.0
        %342 = vmatpush1.msra.mxu0 0.0
        %343 = vmatprep.subr.mxu0 0.0
        %344 = vmatpush1.msra.mxu0 0.0
        %345 = vmatprep.subr.mxu0 0.0
        %346 = vmatpush1.msra.mxu0 0.0
        %347 = vmatprep.subr.mxu0 0.0
        %348 = vmatpush1.msra.mxu0 0.0
        %349 = vmatprep.subr.mxu0 0.0
        %350 = vmatpush1.msra.mxu0 0.0
        %351 = vmatprep.subr.mxu0 0.0
        %352 = vmatpush1.msra.mxu0 0.0
        %353 = vmatprep.subr.mxu0 0.0
        %354 = vmatpush1.msra.mxu0 0.0
        %355 = vmatprep.subr.mxu0 0.0
        %356 = vmatpush1.msra.mxu0 0.0
        %357 = vmatprep.subr.mxu0 0.0
        %358 = vmatpush1.msra.mxu0 0.0
        %359 = vmatprep.subr.mxu0 0.0
        %360 = vmatpush1.msra.mxu0 0.0
        %361 = vmatprep.subr.mxu0 0.0
        %362 = vmatpush1.msra.mxu0 0.0
        %363 = vmatprep.subr.mxu0 0.0
        %364 = vmatpush1.msra.mxu0 0.0
        %365 = vmatprep.subr.mxu0 0.0
        %366 = vmatpush1.msra.mxu0 0.0
        %367 = vmatprep.subr.mxu0 0.0
        %368 = vmatpush1.msra.mxu0 0.0
        %369 = vmatprep.subr.mxu0 0.0
        %370 = vmatpush1.msra.mxu0 0.0
        %371 = vmatprep.subr.mxu0 0.0
        %372 = vmatpush1.msra.mxu0 0.0
        %373 = vmatprep.mubr.f32.mxu0 0.0
        %v374 = vand.u32 %v214, 4294901760
        %375 = vmatmul.mubr.f32.gmra.mrb[0].mxu0 %v374
        %v376 = vpop.f32.mrb[0].mxu0
        %v377 = vadd.f32 %v295, %v376
        %v378 = vpop.f32.mrb[0].mxu0
        %v379 = vadd.f32 %v297, %v378
        %380 = vdwg.mxu0
        %v381 = vand.u32 %v219, 4294901760
        %v382 = vsub.f32 %v219, %v381
        %383 = vmatprep.subr.mxu0 %v382
        %v384 = vand.u32 %v217, 4294901760
        %v385 = vsub.f32 %v217, %v384
        %386 = vmatpush1.msra.mxu0 %v385
        %387 = vmatprep.subr.mxu0 0.0
        %388 = vmatpush1.msra.mxu0 0.0
        %389 = vmatprep.subr.mxu0 0.0
        %390 = vmatpush1.msra.mxu0 0.0
        %391 = vmatprep.subr.mxu0 0.0
        %392 = vmatpush1.msra.mxu0 0.0
        %393 = vmatprep.subr.mxu0 0.0
        %394 = vmatpush1.msra.mxu0 0.0
        %395 = vmatprep.subr.mxu0 0.0
        %396 = vmatpush1.msra.mxu0 0.0
        %397 = vmatprep.subr.mxu0 0.0
        %398 = vmatpush1.msra.mxu0 0.0
        %399 = vmatprep.subr.mxu0 0.0
        %400 = vmatpush1.msra.mxu0 0.0
        %401 = vmatprep.subr.mxu0 0.0
        %402 = vmatpush1.msra.mxu0 0.0
        %403 = vmatprep.subr.mxu0 0.0
        %404 = vmatpush1.msra.mxu0 0.0
        %405 = vmatprep.subr.mxu0 0.0
        %406 = vmatpush1.msra.mxu0 0.0
        %407 = vmatprep.subr.mxu0 0.0
        %408 = vmatpush1.msra.mxu0 0.0
        %409 = vmatprep.subr.mxu0 0.0
        %410 = vmatpush1.msra.mxu0 0.0
        %411 = vmatprep.subr.mxu0 0.0
        %412 = vmatpush1.msra.mxu0 0.0
        %413 = vmatprep.subr.mxu0 0.0
        %414 = vmatpush1.msra.mxu0 0.0
        %415 = vmatprep.subr.mxu0 0.0
        %416 = vmatpush1.msra.mxu0 0.0
        %417 = vmatprep.subr.mxu0 0.0
        %418 = vmatpush1.msra.mxu0 0.0
        %419 = vmatprep.subr.mxu0 0.0
        %420 = vmatpush1.msra.mxu0 0.0
        %421 = vmatprep.subr.mxu0 0.0
        %422 = vmatpush1.msra.mxu0 0.0
        %423 = vmatprep.subr.mxu0 0.0
        %424 = vmatpush1.msra.mxu0 0.0
        %425 = vmatprep.subr.mxu0 0.0
        %426 = vmatpush1.msra.mxu0 0.0
        %427 = vmatprep.subr.mxu0 0.0
        %428 = vmatpush1.msra.mxu0 0.0
        %429 = vmatprep.subr.mxu0 0.0
        %430 = vmatpush1.msra.mxu0 0.0
        %431 = vmatprep.subr.mxu0 0.0
        %432 = vmatpush1.msra.mxu0 0.0
        %433 = vmatprep.subr.mxu0 0.0
        %434 = vmatpush1.msra.mxu0 0.0
        %435 = vmatprep.subr.mxu0 0.0
        %436 = vmatpush1.msra.mxu0 0.0
        %437 = vmatprep.subr.mxu0 0.0
        %438 = vmatpush1.msra.mxu0 0.0
        %439 = vmatprep.subr.mxu0 0.0
        %440 = vmatpush1.msra.mxu0 0.0
        %441 = vmatprep.subr.mxu0 0.0
        %442 = vmatpush1.msra.mxu0 0.0
        %443 = vmatprep.subr.mxu0 0.0
        %444 = vmatpush1.msra.mxu0 0.0
        %445 = vmatprep.subr.mxu0 0.0
        %446 = vmatpush1.msra.mxu0 0.0
        %447 = vmatprep.subr.mxu0 0.0
        %448 = vmatpush1.msra.mxu0 0.0
        %449 = vmatprep.mubr.f32.mxu0 0.0
        %v450 = vand.u32 %v214, 4294901760
        %v451 = vsub.f32 %v214, %v450
        %452 = vmatmul.mubr.f32.gmra.mrb[0].mxu0 %v451
        %v453 = vpop.f32.mrb[0].mxu0
        %v454 = vadd.f32 %v377, %v453
        %v455 = vpop.f32.mrb[0].mxu0
        %v456 = vadd.f32 %v379, %v455
        %457 = vdwg.mxu0
        %v458 = vand.u32 %v219, 4294901760
        %459 = vmatprep.subr.mxu0 %v458
        %v460 = vand.u32 %v217, 4294901760
        %461 = vmatpush1.msra.mxu0 %v460
        %462 = vmatprep.subr.mxu0 0.0
        %463 = vmatpush1.msra.mxu0 0.0
        %464 = vmatprep.subr.mxu0 0.0
        %465 = vmatpush1.msra.mxu0 0.0
        %466 = vmatprep.subr.mxu0 0.0
        %467 = vmatpush1.msra.mxu0 0.0
        %468 = vmatprep.subr.mxu0 0.0
        %469 = vmatpush1.msra.mxu0 0.0
        %470 = vmatprep.subr.mxu0 0.0
        %471 = vmatpush1.msra.mxu0 0.0
        %472 = vmatprep.subr.mxu0 0.0
        %473 = vmatpush1.msra.mxu0 0.0
        %474 = vmatprep.subr.mxu0 0.0
        %475 = vmatpush1.msra.mxu0 0.0
        %476 = vmatprep.subr.mxu0 0.0
        %477 = vmatpush1.msra.mxu0 0.0
        %478 = vmatprep.subr.mxu0 0.0
        %479 = vmatpush1.msra.mxu0 0.0
        %480 = vmatprep.subr.mxu0 0.0
        %481 = vmatpush1.msra.mxu0 0.0
        %482 = vmatprep.subr.mxu0 0.0
        %483 = vmatpush1.msra.mxu0 0.0
        %484 = vmatprep.subr.mxu0 0.0
        %485 = vmatpush1.msra.mxu0 0.0
        %486 = vmatprep.subr.mxu0 0.0
        %487 = vmatpush1.msra.mxu0 0.0
        %488 = vmatprep.subr.mxu0 0.0
        %489 = vmatpush1.msra.mxu0 0.0
        %490 = vmatprep.subr.mxu0 0.0
        %491 = vmatpush1.msra.mxu0 0.0
        %492 = vmatprep.subr.mxu0 0.0
        %493 = vmatpush1.msra.mxu0 0.0
        %494 = vmatprep.subr.mxu0 0.0
        %495 = vmatpush1.msra.mxu0 0.0
        %496 = vmatprep.subr.mxu0 0.0
        %497 = vmatpush1.msra.mxu0 0.0
        %498 = vmatprep.subr.mxu0 0.0
        %499 = vmatpush1.msra.mxu0 0.0
        %500 = vmatprep.subr.mxu0 0.0
        %501 = vmatpush1.msra.mxu0 0.0
        %502 = vmatprep.subr.mxu0 0.0
        %503 = vmatpush1.msra.mxu0 0.0
        %504 = vmatprep.subr.mxu0 0.0
        %505 = vmatpush1.msra.mxu0 0.0
        %506 = vmatprep.subr.mxu0 0.0
        %507 = vmatpush1.msra.mxu0 0.0
        %508 = vmatprep.subr.mxu0 0.0
        %509 = vmatpush1.msra.mxu0 0.0
        %510 = vmatprep.subr.mxu0 0.0
        %511 = vmatpush1.msra.mxu0 0.0
        %512 = vmatprep.subr.mxu0 0.0
        %513 = vmatpush1.msra.mxu0 0.0
        %514 = vmatprep.subr.mxu0 0.0
        %515 = vmatpush1.msra.mxu0 0.0
        %516 = vmatprep.subr.mxu0 0.0
        %517 = vmatpush1.msra.mxu0 0.0
        %518 = vmatprep.subr.mxu0 0.0
        %519 = vmatpush1.msra.mxu0 0.0
        %520 = vmatprep.subr.mxu0 0.0
        %521 = vmatpush1.msra.mxu0 0.0
        %522 = vmatprep.subr.mxu0 0.0
        %523 = vmatpush1.msra.mxu0 0.0
        %524 = vmatprep.mubr.f32.mxu0 0.0
        %v525 = vand.u32 %v214, 4294901760
        %v526 = vsub.f32 %v214, %v525
        %v527 = vand.u32 %v526, 4294901760
        %528 = vmatmul.mubr.f32.gmra.mrb[0].mxu0 %v527
        %v529 = vpop.f32.mrb[0].mxu0
        %v530 = vadd.f32 %v454, %v529
        %v531 = vpop.f32.mrb[0].mxu0
        %v532 = vadd.f32 %v456, %v531
        %533 = vdwg.mxu0
        %v534 = vand.u32 %v219, 4294901760
        %v535 = vsub.f32 %v219, %v534
        %v536 = vand.u32 %v535, 4294901760
        %537 = vmatprep.subr.mxu0 %v536
        %v538 = vand.u32 %v217, 4294901760
        %v539 = vsub.f32 %v217, %v538
        %v540 = vand.u32 %v539, 4294901760
        %541 = vmatpush1.msra.mxu0 %v540
        %542 = vmatprep.subr.mxu0 0.0
        %543 = vmatpush1.msra.mxu0 0.0
        %544 = vmatprep.subr.mxu0 0.0
        %545 = vmatpush1.msra.mxu0 0.0
        %546 = vmatprep.subr.mxu0 0.0
        %547 = vmatpush1.msra.mxu0 0.0
        %548 = vmatprep.subr.mxu0 0.0
        %549 = vmatpush1.msra.mxu0 0.0
        %550 = vmatprep.subr.mxu0 0.0
        %551 = vmatpush1.msra.mxu0 0.0
        %552 = vmatprep.subr.mxu0 0.0
        %553 = vmatpush1.msra.mxu0 0.0
        %554 = vmatprep.subr.mxu0 0.0
        %555 = vmatpush1.msra.mxu0 0.0
        %556 = vmatprep.subr.mxu0 0.0
        %557 = vmatpush1.msra.mxu0 0.0
        %558 = vmatprep.subr.mxu0 0.0
        %559 = vmatpush1.msra.mxu0 0.0
        %560 = vmatprep.subr.mxu0 0.0
        %561 = vmatpush1.msra.mxu0 0.0
        %562 = vmatprep.subr.mxu0 0.0
        %563 = vmatpush1.msra.mxu0 0.0
        %564 = vmatprep.subr.mxu0 0.0
        %565 = vmatpush1.msra.mxu0 0.0
        %566 = vmatprep.subr.mxu0 0.0
        %567 = vmatpush1.msra.mxu0 0.0
        %568 = vmatprep.subr.mxu0 0.0
        %569 = vmatpush1.msra.mxu0 0.0
        %570 = vmatprep.subr.mxu0 0.0
        %571 = vmatpush1.msra.mxu0 0.0
        %572 = vmatprep.subr.mxu0 0.0
        %573 = vmatpush1.msra.mxu0 0.0
        %574 = vmatprep.subr.mxu0 0.0
        %575 = vmatpush1.msra.mxu0 0.0
        %576 = vmatprep.subr.mxu0 0.0
        %577 = vmatpush1.msra.mxu0 0.0
        %578 = vmatprep.subr.mxu0 0.0
        %579 = vmatpush1.msra.mxu0 0.0
        %580 = vmatprep.subr.mxu0 0.0
        %581 = vmatpush1.msra.mxu0 0.0
        %582 = vmatprep.subr.mxu0 0.0
        %583 = vmatpush1.msra.mxu0 0.0
        %584 = vmatprep.subr.mxu0 0.0
        %585 = vmatpush1.msra.mxu0 0.0
        %586 = vmatprep.subr.mxu0 0.0
        %587 = vmatpush1.msra.mxu0 0.0
        %588 = vmatprep.subr.mxu0 0.0
        %589 = vmatpush1.msra.mxu0 0.0
        %590 = vmatprep.subr.mxu0 0.0
        %591 = vmatpush1.msra.mxu0 0.0
        %592 = vmatprep.subr.mxu0 0.0
        %593 = vmatpush1.msra.mxu0 0.0
        %594 = vmatprep.subr.mxu0 0.0
        %595 = vmatpush1.msra.mxu0 0.0
        %596 = vmatprep.subr.mxu0 0.0
        %597 = vmatpush1.msra.mxu0 0.0
        %598 = vmatprep.subr.mxu0 0.0
        %599 = vmatpush1.msra.mxu0 0.0
        %600 = vmatprep.subr.mxu0 0.0
        %601 = vmatpush1.msra.mxu0 0.0
        %602 = vmatprep.subr.mxu0 0.0
        %603 = vmatpush1.msra.mxu0 0.0
        %604 = vmatprep.mubr.f32.mxu0 0.0
        %v605 = vand.u32 %v214, 4294901760
        %606 = vmatmul.mubr.f32.gmra.mrb[0].mxu0 %v605
        %v607 = vpop.f32.mrb[0].mxu0
        %v608 = vadd.f32 %v530, %v607
        %v609 = vpop.f32.mrb[0].mxu0
        %v610 = vadd.f32 %v532, %v609
        %611 = vdwg.mxu0
        %v612 = vand.u32 %v219, 4294901760
        %613 = vmatprep.subr.mxu0 %v612
        %v614 = vand.u32 %v217, 4294901760
        %615 = vmatpush1.msra.mxu0 %v614
        %616 = vmatprep.subr.mxu0 0.0
        %617 = vmatpush1.msra.mxu0 0.0
        %618 = vmatprep.subr.mxu0 0.0
        %619 = vmatpush1.msra.mxu0 0.0
        %620 = vmatprep.subr.mxu0 0.0
        %621 = vmatpush1.msra.mxu0 0.0
        %622 = vmatprep.subr.mxu0 0.0
        %623 = vmatpush1.msra.mxu0 0.0
        %624 = vmatprep.subr.mxu0 0.0
        %625 = vmatpush1.msra.mxu0 0.0
        %626 = vmatprep.subr.mxu0 0.0
        %627 = vmatpush1.msra.mxu0 0.0
        %628 = vmatprep.subr.mxu0 0.0
        %629 = vmatpush1.msra.mxu0 0.0
        %630 = vmatprep.subr.mxu0 0.0
        %631 = vmatpush1.msra.mxu0 0.0
        %632 = vmatprep.subr.mxu0 0.0
        %633 = vmatpush1.msra.mxu0 0.0
        %634 = vmatprep.subr.mxu0 0.0
        %635 = vmatpush1.msra.mxu0 0.0
        %636 = vmatprep.subr.mxu0 0.0
        %637 = vmatpush1.msra.mxu0 0.0
        %638 = vmatprep.subr.mxu0 0.0
        %639 = vmatpush1.msra.mxu0 0.0
        %640 = vmatprep.subr.mxu0 0.0
        %641 = vmatpush1.msra.mxu0 0.0
        %642 = vmatprep.subr.mxu0 0.0
        %643 = vmatpush1.msra.mxu0 0.0
        %644 = vmatprep.subr.mxu0 0.0
        %645 = vmatpush1.msra.mxu0 0.0
        %646 = vmatprep.subr.mxu0 0.0
        %647 = vmatpush1.msra.mxu0 0.0
        %648 = vmatprep.subr.mxu0 0.0
        %649 = vmatpush1.msra.mxu0 0.0
        %650 = vmatprep.subr.mxu0 0.0
        %651 = vmatpush1.msra.mxu0 0.0
        %652 = vmatprep.subr.mxu0 0.0
        %653 = vmatpush1.msra.mxu0 0.0
        %654 = vmatprep.subr.mxu0 0.0
        %655 = vmatpush1.msra.mxu0 0.0
        %656 = vmatprep.subr.mxu0 0.0
        %657 = vmatpush1.msra.mxu0 0.0
        %658 = vmatprep.subr.mxu0 0.0
        %659 = vmatpush1.msra.mxu0 0.0
        %660 = vmatprep.subr.mxu0 0.0
        %661 = vmatpush1.msra.mxu0 0.0
        %662 = vmatprep.subr.mxu0 0.0
        %663 = vmatpush1.msra.mxu0 0.0
        %664 = vmatprep.subr.mxu0 0.0
        %665 = vmatpush1.msra.mxu0 0.0
        %666 = vmatprep.subr.mxu0 0.0
        %667 = vmatpush1.msra.mxu0 0.0
        %668 = vmatprep.subr.mxu0 0.0
        %669 = vmatpush1.msra.mxu0 0.0
        %670 = vmatprep.subr.mxu0 0.0
        %671 = vmatpush1.msra.mxu0 0.0
        %672 = vmatprep.subr.mxu0 0.0
        %673 = vmatpush1.msra.mxu0 0.0
        %674 = vmatprep.subr.mxu0 0.0
        %675 = vmatpush1.msra.mxu0 0.0
        %676 = vmatprep.subr.mxu0 0.0
        %677 = vmatpush1.msra.mxu0 0.0
        %678 = vmatprep.mubr.f32.mxu0 0.0
        %v679 = vand.u32 %v214, 4294901760
        %680 = vmatmul.mubr.f32.gmra.mrb[0].mxu0 %v679
        %v681 = vpop.f32.mrb[0].mxu0
        %v682 = vadd.f32 %v608, %v681
        %v683 = vpop.f32.mrb[0].mxu0
        %v684 = vadd.f32 %v610, %v683
        %685 = vdwg.mxu0
        %v688 = vcombine.low %v682, %v684
        %v690 = vadd.f32 %v209, %v688
        %692 = vset.pattern.permute.xlu0 0
        %693 = vperm.xlu0 %692, %v208
        %v694 = vpop.permute.xlu0 %693
        %v696 = vunpack.c.l.s4 839922192
        %v697 = vunpack.c.0.s8 %v696
        %v698 = vlaneseq
        %v699 = vshrl.u32 %v698, 7
        %v700 = vsub.s32 %v697, %v699
        %v701 = vrot.slane %v694, %v700
        %v703 = vadd.f32 %v690, %v701
        %704 = vst [vmem:[%s204] sm:$0xff] %v703
        %s705 = sand.u32 %s112, 1
        %s706 = scalar_lea.sflag [#allocation4], %s705
        %s707 = sand.u32 %s112, 1
        %s708 = smul.addr %s707, 8
        %s709 = scalar_lea.vmem [#allocation5], %s708
        // Predicated region
        $region37: #{tpu_custom_call.1} parent=31 // pred_check
          %p710 = pneg %p122
        $region38: #{tpu_custom_call.1} parent=31 // pred_check_branch
          %712 = sbr.rel (%p710) target = $region40
        $region39: #{tpu_custom_call.1} parent=31 // pred_region
          %s713 = smul.u32 2, %s25
          %s715 = ssub.s32 128, 128
          %716 = vsyncadd %s706, %s715
          %s717 = smul.addr %s24, 2
          %s718 = sadd.s32 %s713, %s717
          %s719 = smul.addr %s718, 64
          %s720 = scalar_lea.hbm %s3, %s719
          %s722 = sshll.u32 %s709, 4
          %s723 = int_to_ptr.vmem [resolvable:$true] %s722
          %725 = dma.vmem_to_hbm [thread:$0]  %s723, 128, %s720, %s706
        $region40: #{tpu_custom_call.1} parent=31 // pred_fallthru
          _
      $region32: #{tpu_custom_call.1} parent=5 // pred_fallthru
        _
      %p726 = scmp.le.s32.totalorder 2, %s15
      // Predicated region
      $region41: #{tpu_custom_call.1} parent=5 // pred_check
        %p727 = pneg %p726
      $region42: #{tpu_custom_call.1} parent=5 // pred_check_branch
        %729 = sbr.rel (%p727) target = $region44
      $region43: #{tpu_custom_call.1} parent=5 // pred_region
        %s730 = ssub.s32 %s15, 2
        // Predicated region
        $region45: #{tpu_custom_call.1} parent=43 // pred_check
          %p731 = pneg %p128
        $region46: #{tpu_custom_call.1} parent=43 // pred_check_branch
          %733 = sbr.rel (%p731) target = $region48
        $region47: #{tpu_custom_call.1} parent=43 // pred_region
          %s734 = sand.u32 %s113, 1
          %s735 = scalar_lea.sflag [#allocation4], %s734
          %s736 = sand.u32 %s113, 1
          %s737 = smul.addr %s736, 8
          %s738 = scalar_lea.vmem [#allocation5], %s737
          %739 = dma.done %s735, 128
        $region48: #{tpu_custom_call.1} parent=43 // pred_fallthru
          _
      $region44: #{tpu_custom_call.1} parent=5 // pred_fallthru
        _
    $region6: #{tpu_custom_call.1} parent=1 // loop_footer
      %s19 = sadd.s32 1, %s15
    $region7: #{tpu_custom_call.1} parent=1 // loop_footer_branch
      %14 = sbr.rel target = $region3
    $region8: #{tpu_custom_call.1} parent=1 // loop_exit
      _
    %740 = vsyncpa [#allocation3], 1
    %s741 = scalar_lea.sflag [#allocation3], 1
    %742 = vsyncpa %s741, 1
    %743 = vsyncpa [#allocation4], 1
    %s744 = scalar_lea.sflag [#allocation4], 1
    %745 = vsyncpa %s744, 1

</llo_original>
